<compile_context>
chip_gen: v5e
topology: v5e:2x2
jax: 0.10.0
libtpu: 0.0.40
codegen_flags: <defaults>
</compile_context>

<pallas_src>
import functools

import jax
import jax.numpy as jnp
from jax.experimental import pallas as pl
from jax.experimental.pallas import tpu as pltpu


def _box_filter_kernel(a_ref, m_ref, x_ref, o_ref, *, r, tbw):
    # a_ref: (H, H) band matrix; m_ref: (2r+1, TBW) boundary masks (f32);
    # x_ref/o_ref: (1, H, TBW) folded image slab (TB images side by side).
    x = x_ref[0]
    # ---- H pass on the MXU: band_H @ X, f32 accumulation ----
    tmp = jnp.dot(a_ref[...], x, preferred_element_type=jnp.float32)
    # ---- W pass: 2r+1 shifted adds along the folded lane axis (XLU/VPU) ----
    out = tmp                                  # d = 0 term (mask is all ones)
    for d in range(1, r + 1):
        # out[:, p] += tmp[:, p + d]   valid while (p % W) + d <= W - 1
        fwd = pltpu.roll(tmp, shift=(tbw - d) % tbw, axis=1)
        out = out + m_ref[pl.ds(r + d, 1), :] * fwd
        # out[:, p] += tmp[:, p - d]   valid while (p % W) - d >= 0
        bwd = pltpu.roll(tmp, shift=d, axis=1)
        out = out + m_ref[pl.ds(r - d, 1), :] * bwd
    o_ref[0] = out.astype(o_ref.dtype)


def box_filter(x, r, compute_dtype=None):
    """Pallas implementation of BoxFilter(r).forward(x), x in NCHW."""
    assert x.ndim == 4
    B, C, H, W = x.shape
    assert H > 2 * r + 1 and W > 2 * r + 1, "spatial dims must exceed 2*r+1"

    if compute_dtype is None:
        compute_dtype = (x.dtype if jnp.issubdtype(x.dtype, jnp.floating)
                         else jnp.float32)
        # TODO(synk): integer inputs take the float path (MXU is float-only);
        # exact integer box sums would need a VPU-only variant.

    N = B * C
    # Fold enough images into the lane axis for a lane-dense (~512-wide) block;
    # this also amortizes the ~600-cycle per-grid-step overhead.
    target_lanes = 512
    TB = 1 if W >= target_lanes else -(-target_lanes // W)
    TB = max(1, min(TB, N))
    G = -(-N // TB)
    Npad = G * TB
    TBW = TB * W

    # Band (window-selection) matrix for the H pass: A[i,k] = 1 iff |i-k| <= r.
    ih = jnp.arange(H)
    A = (jnp.abs(ih[:, None] - ih[None, :]) <= r).astype(compute_dtype)

    # Per-column boundary masks for the W pass (row k <-> offset d = k - r):
    #   masks[r+d, p] = 1  iff  0 <= (p % W) + d <= W - 1
    col = jnp.arange(TBW) % W
    dd = jnp.arange(-r, r + 1)
    masks = (((col[None, :] + dd[:, None]) >= 0) &
             ((col[None, :] + dd[:, None]) <= W - 1)).astype(jnp.float32)

    xr = x.reshape(N, H, W).astype(compute_dtype)
    if Npad != N:
        xr = jnp.concatenate(
            [xr, jnp.zeros((Npad - N, H, W), compute_dtype)], axis=0)
    # Fold batch into lanes: (G, TB, H, W) -> (G, H, TB*W)   [layout plumbing]
    xg = xr.reshape(G, TB, H, W).transpose(0, 2, 1, 3).reshape(G, H, TBW)

    # Explicit VMEM budget: constants + double-buffered in/out slabs, capped at
    # 64 MiB so the same configuration remains valid on v7x.
    itemsize = jnp.dtype(compute_dtype).itemsize
    out_itemsize = jnp.dtype(x.dtype).itemsize
    vmem_bytes = (2 * (H * H * itemsize + int(masks.size) * 4)
                  + 2 * H * TBW * itemsize
                  + 2 * H * TBW * out_itemsize
                  + (2 << 20))
    vmem_bytes = int(min(max(vmem_bytes, 8 << 20), 64 << 20))
    # TODO(synk): very large H/W (band matrix + slabs > 64 MiB) would need an
    # H/W-tiled grid with an accumulator; out of scope for these shapes.

    kernel = functools.partial(_box_filter_kernel, r=r, tbw=TBW)

    out = pl.pallas_call(
        kernel,
        out_shape=jax.ShapeDtypeStruct((G, H, TBW), x.dtype),
        grid_spec=pltpu.PrefetchScalarGridSpec(
            num_scalar_prefetch=0,
            grid=(G,),
            in_specs=[
                pl.BlockSpec((H, H), lambda g: (0, 0)),            # band_H
                pl.BlockSpec((2 * r + 1, TBW), lambda g: (0, 0)),  # masks
                pl.BlockSpec((1, H, TBW), lambda g: (g, 0, 0)),    # folded slab
            ],
            out_specs=pl.BlockSpec((1, H, TBW), lambda g: (g, 0, 0)),
        ),
        compiler_params=pltpu.CompilerParams(
            dimension_semantics=("parallel",),
            vmem_limit_bytes=vmem_bytes),
    )(A, masks, xg)

    # Unfold lanes back to (B, C, H, W).
    out = (out.reshape(G, H, TB, W).transpose(0, 2, 1, 3)
              .reshape(Npad, H, W)[:N].reshape(B, C, H, W))
    return out


# ---- pure-JAX reference replicating the PyTorch code verbatim ----
def _diff_x(a, r):
    left = a[:, :, r:2 * r + 1]
    middle = a[:, :, 2 * r + 1:] - a[:, :, :-2 * r - 1]
    right = a[:, :, -1:] - a[:, :, -2 * r - 1:-r - 1]
    return jnp.concatenate([left, middle, right], axis=2)


def _diff_y(a, r):
    left = a[:, :, :, r:2 * r + 1]
    middle = a[:, :, :, 2 * r + 1:] - a[:, :, :, :-2 * r - 1]
    right = a[:, :, :, -1:] - a[:, :, :, -2 * r - 1:-r - 1]
    return jnp.concatenate([left, middle, right], axis=3)


def box_filter_ref(x, r):
    return _diff_y(_diff_x(jnp.cumsum(x, axis=2), r).cumsum(axis=3), r)


if __name__ == "__main__":
    r = 2
    key = jax.random.PRNGKey(0)
    x = jax.random.normal(key, (2, 4, 16, 16), dtype=jnp.float32)

    out = jax.block_until_ready(box_filter(x, r))
    ref = jax.block_until_ready(box_filter_ref(x, r))

    assert out.shape == ref.shape == x.shape
    assert out.dtype == x.dtype
    assert jnp.allclose(out, ref, rtol=1e-4, atol=1e-4), (
        float(jnp.max(jnp.abs(out - ref))))
    print("KERNEL_OK")
</pallas_src>

<mosaic_0001>
module attributes {stable_mosaic.version = 11 : i64} {
  func.func @_box_filter_kernel(%arg0: i32, %arg1: memref<16x16xf32, #tpu.memory_space<vmem>>, %arg2: memref<5x128xf32, #tpu.memory_space<vmem>>, %arg3: memref<1x16x128xf32, #tpu.memory_space<vmem>>, %arg4: memref<1x16x128xf32, #tpu.memory_space<vmem>>) attributes {dimension_semantics = [#tpu.dimension_semantics<parallel>], iteration_bounds = array<i64: 1>, scalar_prefetch = 0 : i64, scratch_operands = 0 : i64, tpu.core_type = #tpu.core_type<tc>, window_params = [{pipeline_mode = #tpu.pipeline_mode<synchronous>, transform_indices = @transform_0, window_bounds = array<i64: 16, 16>}, {pipeline_mode = #tpu.pipeline_mode<synchronous>, transform_indices = @transform_1, window_bounds = array<i64: 5, 128>}, {transform_indices = @transform_2, window_bounds = array<i64: 1, 16, 128>}, {transform_indices = @transform_3, window_bounds = array<i64: 1, 16, 128>}]} {
    %c0 = arith.constant 0 : index
    %c0_0 = arith.constant 0 : index
    %c0_1 = arith.constant 0 : index
    %0 = vector.load %arg3[%c0, %c0_0, %c0_1] : memref<1x16x128xf32, #tpu.memory_space<vmem>>, vector<1x16x128xf32>
    %1 = vector.shape_cast %0 : vector<1x16x128xf32> to vector<16x128xf32>
    %c0_2 = arith.constant 0 : index
    %c0_3 = arith.constant 0 : index
    %2 = vector.load %arg1[%c0_2, %c0_3] : memref<16x16xf32, #tpu.memory_space<vmem>>, vector<16x16xf32>
    %cst = arith.constant dense<0.000000e+00> : vector<16x128xf32>
    %3 = tpu.matmul %2, %1, %cst {dimension_numbers = #tpu.dot_dimension_numbers<[1], [0], [0], [1], [0, 0, 1, 1], [], []>} : vector<16x16xf32>, vector<16x128xf32>, vector<16x128xf32> -> vector<16x128xf32>
    %c127_i32 = arith.constant 127 : i32
    %4 = tpu.dynamic_rotate %3 by %c127_i32 dim 1 : vector<16x128xf32>, i32 -> vector<16x128xf32>
    %c3 = arith.constant 3 : index
    %c0_4 = arith.constant 0 : index
    %5 = vector.load %arg2[%c3, %c0_4] : memref<5x128xf32, #tpu.memory_space<vmem>>, vector<1x128xf32>
    %6 = vector.broadcast %5 : vector<1x128xf32> to vector<16x128xf32>
    %7 = arith.mulf %6, %4 : vector<16x128xf32>
    %8 = arith.addf %3, %7 : vector<16x128xf32>
    %c1_i32 = arith.constant 1 : i32
    %9 = tpu.dynamic_rotate %3 by %c1_i32 dim 1 : vector<16x128xf32>, i32 -> vector<16x128xf32>
    %c1 = arith.constant 1 : index
    %c0_5 = arith.constant 0 : index
    %10 = vector.load %arg2[%c1, %c0_5] : memref<5x128xf32, #tpu.memory_space<vmem>>, vector<1x128xf32>
    %11 = vector.broadcast %10 : vector<1x128xf32> to vector<16x128xf32>
    %12 = arith.mulf %11, %9 : vector<16x128xf32>
    %13 = arith.addf %8, %12 : vector<16x128xf32>
    %c126_i32 = arith.constant 126 : i32
    %14 = tpu.dynamic_rotate %3 by %c126_i32 dim 1 : vector<16x128xf32>, i32 -> vector<16x128xf32>
    %c4 = arith.constant 4 : index
    %c0_6 = arith.constant 0 : index
    %15 = vector.load %arg2[%c4, %c0_6] : memref<5x128xf32, #tpu.memory_space<vmem>>, vector<1x128xf32>
    %16 = vector.broadcast %15 : vector<1x128xf32> to vector<16x128xf32>
    %17 = arith.mulf %16, %14 : vector<16x128xf32>
    %18 = arith.addf %13, %17 : vector<16x128xf32>
    %c2_i32 = arith.constant 2 : i32
    %19 = tpu.dynamic_rotate %3 by %c2_i32 dim 1 : vector<16x128xf32>, i32 -> vector<16x128xf32>
    %c0_7 = arith.constant 0 : index
    %c0_8 = arith.constant 0 : index
    %20 = vector.load %arg2[%c0_7, %c0_8] : memref<5x128xf32, #tpu.memory_space<vmem>>, vector<1x128xf32>
    %21 = vector.broadcast %20 : vector<1x128xf32> to vector<16x128xf32>
    %22 = arith.mulf %21, %19 : vector<16x128xf32>
    %23 = arith.addf %18, %22 : vector<16x128xf32>
    %c0_9 = arith.constant 0 : index
    %c0_10 = arith.constant 0 : index
    %c0_11 = arith.constant 0 : index
    %24 = vector.load %arg4[%c0_9, %c0_10, %c0_11] : memref<1x16x128xf32, #tpu.memory_space<vmem>>, vector<1x16x128xf32>
    %25 = vector.shape_cast %24 : vector<1x16x128xf32> to vector<16x128xf32>
    %26 = vector.shape_cast %23 : vector<16x128xf32> to vector<1x16x128xf32>
    tpu.vector_store %arg4[%c0_9, %c0_10, %c0_11], %26 {strides = array<i32>} : memref<1x16x128xf32, #tpu.memory_space<vmem>>, vector<1x16x128xf32>,
    return
  }
  func.func @transform_0(%arg0: i32) -> (i32, i32) {
    %c0_i32 = arith.constant 0 : i32
    %c0_i32_0 = arith.constant 0 : i32
    %c0_i32_1 = arith.constant 0 : i32
    return %c0_i32, %c0_i32_0 : i32, i32
  }
  func.func @transform_1(%arg0: i32) -> (i32, i32) {
    %c0_i32 = arith.constant 0 : i32
    %c0_i32_0 = arith.constant 0 : i32
    %c0_i32_1 = arith.constant 0 : i32
    return %c0_i32, %c0_i32_0 : i32, i32
  }
  func.func @transform_2(%arg0: i32) -> (i32, i32, i32) {
    %c0_i32 = arith.constant 0 : i32
    %c0_i32_0 = arith.constant 0 : i32
    %c0_i32_1 = arith.constant 0 : i32
    return %arg0, %c0_i32, %c0_i32_0 : i32, i32, i32
  }
  func.func @transform_3(%arg0: i32) -> (i32, i32, i32) {
    %c0_i32 = arith.constant 0 : i32
    %c0_i32_0 = arith.constant 0 : i32
    %c0_i32_1 = arith.constant 0 : i32
    return %arg0, %c0_i32, %c0_i32_0 : i32, i32, i32
  }
}

</mosaic_0001>

<llo_original>
// kernel: tpu_custom_call.1
$region0: #{tpu_custom_call.1}
  #allocation0 [shape = 'u32[]', space=smem, size = 0x4, offset = 0x4, fixed_abs, tag = 'smem constant byte address 0x4 - core index']
  #allocation1 [shape = 'u32[72,128]{1,0:T(1,128)}', space=vmem, size = 0x9000, scoped, tag = 'internal scratch']
  %s0 = inlined_call_operand.hbm [shape: f32[16,16], index: 0, kind: input, shape index: {}]
  %s1 = inlined_call_operand.hbm [shape: f32[5,128], index: 1, kind: input, shape index: {}]
  %s2 = inlined_call_operand.hbm [shape: f32[1,16,128], index: 2, kind: input, shape index: {}]
  %s3 = inlined_call_operand.hbm [shape: f32[1,16,128], index: 3, kind: output, shape index: {}]
  %s4 = sld [smem:[#allocation0]]
  $region34: #{tpu_custom_call.1} parent=0
    _
  %s6 = ssub.s32 1, %s4
  %s7 = scalar_select 0, %s6, %s4
  $region1: #{tpu_custom_call.1} parent=0
    #allocation2 [shape = 'u8[8192]{0}', space=vmem, size = 0x2000, scoped, tag = 'input window, operand 0, single buffered']
    #allocation3 [shape = 's32[1]{0}', space=sflag, size = 0x4, scoped, tag = 'scoped memory for tpu_custom_call.1']
    #allocation4 [shape = 's32[1]{0}', space=sflag, size = 0x4, scoped, tag = 'scoped memory for tpu_custom_call.1']
    #allocation5 [shape = 'u8[4096]{0}', space=vmem, size = 0x1000, scoped, tag = 'input window, operand 1, single buffered']
    #allocation6 [shape = 's32[1]{0}', space=sflag, size = 0x4, scoped, tag = 'scoped memory for tpu_custom_call.1']
    #allocation7 [shape = 'u8[8192]{0}', space=vmem, size = 0x2000, scoped, tag = 'input window, operand 2, single buffered']
    #allocation8 [shape = 'u8[8192]{0}', space=vmem, size = 0x2000, scoped, tag = 'output window, operand 0, single buffered']
    %8 = vsyncpa [#allocation3], 0
    %9 = vsyncpa [#allocation6], 0
    %10 = vsyncpa [#allocation4], 0
    // Predicated region
    $region2: #{tpu_custom_call.1} parent=1 // pred_check
      _
    $region3: #{tpu_custom_call.1} parent=1 // pred_check_branch
      %12 = sbr.rel (0) target = $region5
    $region4: #{tpu_custom_call.1} parent=1 // pred_region
      %14 = vsyncadd [#allocation3], 0
      %s15 = sshll.u32 %s0, 4
      %s16 = int_to_ptr.hbm [resolvable:$true] %s15
      %s17 = sshll.u32 [#allocation2], 4
      %s18 = int_to_ptr.vmem [resolvable:$true] %s17
      %23 = dma.hbm_to_vmem [thread:$0]  %s16, 256, %s18, [#allocation3], 128, 128, 8
    $region5: #{tpu_custom_call.1} parent=1 // pred_fallthru
      _
    // Predicated region
    $region6: #{tpu_custom_call.1} parent=1 // pred_check
      _
    $region7: #{tpu_custom_call.1} parent=1 // pred_check_branch
      %25 = sbr.rel (0) target = $region9
    $region8: #{tpu_custom_call.1} parent=1 // pred_region
      %27 = vsyncadd [#allocation6], 0
      %s29 = sshll.u32 %s1, 4
      %s30 = int_to_ptr.hbm [resolvable:$true] %s29
      %s31 = sshll.u32 [#allocation5], 4
      %s32 = int_to_ptr.vmem [resolvable:$true] %s31
      %34 = dma.hbm_to_vmem [thread:$0]  %s30, 128, %s32, [#allocation6]
    $region9: #{tpu_custom_call.1} parent=1 // pred_fallthru
      _
    // Predicated region
    $region10: #{tpu_custom_call.1} parent=1 // pred_check
      _
    $region11: #{tpu_custom_call.1} parent=1 // pred_check_branch
      %36 = sbr.rel (0) target = $region13
    $region12: #{tpu_custom_call.1} parent=1 // pred_region
      %38 = vsyncadd [#allocation6], 0
      %s39 = sshll.u32 %s2, 4
      %s40 = int_to_ptr.hbm [resolvable:$true] %s39
      %s41 = sshll.u32 [#allocation7], 4
      %s42 = int_to_ptr.vmem [resolvable:$true] %s41
      %47 = dma.hbm_to_vmem [thread:$0]  %s40, 256, %s42, [#allocation6], 128, 128, 8
    $region13: #{tpu_custom_call.1} parent=1 // pred_fallthru
      _
    // Predicated region
    $region14: #{tpu_custom_call.1} parent=1 // pred_check
      _
    $region15: #{tpu_custom_call.1} parent=1 // pred_check_branch
      %49 = sbr.rel (0) target = $region17
    $region16: #{tpu_custom_call.1} parent=1 // pred_region
      %51 = dma.done [#allocation3], 256
    $region17: #{tpu_custom_call.1} parent=1 // pred_fallthru
      _
    // Predicated region
    $region18: #{tpu_custom_call.1} parent=1 // pred_check
      _
    $region19: #{tpu_custom_call.1} parent=1 // pred_check_branch
      %53 = sbr.rel (0) target = $region21
    $region20: #{tpu_custom_call.1} parent=1 // pred_region
      %55 = dma.done [#allocation6], 128
    $region21: #{tpu_custom_call.1} parent=1 // pred_fallthru
      _
    // Predicated region
    $region22: #{tpu_custom_call.1} parent=1 // pred_check
      _
    $region23: #{tpu_custom_call.1} parent=1 // pred_check_branch
      %57 = sbr.rel (0) target = $region25
    $region24: #{tpu_custom_call.1} parent=1 // pred_region
      %59 = dma.done [#allocation6], 256
    $region25: #{tpu_custom_call.1} parent=1 // pred_fallthru
      _
    %v60 = vld [vmem:[#allocation7] sm:$0xff]
    %v61 = vld [vmem:[#allocation7 + $0x8] sm:$0xff]
    %v62 = vld [vmem:[#allocation2] sm:$0xff]
    %v63 = vld [vmem:[#allocation2 + $0x8] sm:$0xff]
    %vm64 = vcmask 130048
    %v66 = vsel %vm64, %v62, 0
    %v69 = vsel %vm64, %v63, 0
    %71 = vmatpush.msra.mxu0 0.0
    %72 = vmatpush.msra.mxu0 0.0
    %73 = vmatpush.msra.mxu0 0.0
    %74 = vmatpush.msra.mxu0 0.0
    %75 = vmatpush.msra.mxu0 0.0
    %76 = vmatpush.msra.mxu0 0.0
    %77 = vmatpush.msra.mxu0 0.0
    %78 = vmatpush.msra.mxu0 0.0
    %79 = vmatpush.msra.mxu0 0.0
    %80 = vmatpush.msra.mxu0 0.0
    %81 = vmatpush.msra.mxu0 0.0
    %82 = vmatpush.msra.mxu0 0.0
    %83 = vmatpush.msra.mxu0 0.0
    %84 = vmatpush.msra.mxu0 0.0
    %85 = vmatpush.msra.mxu0 %v61
    %86 = vmatpush.msra.mxu0 %v60
    %87 = vmatmul.f32.gmra.mxu0 %v66
    %v88 = vpop.f32.mrf.mxu0
    %v89 = vadd.f32 0.0, %v88
    %90 = vmatmul.f32.gmra.mxu0 %v69
    %v91 = vpop.f32.mrf.mxu0
    %v92 = vadd.f32 0.0, %v91
    %93 = vdwg.mxu0
    %94 = vrot.lane.b32.xlu0 %v89, 127
    %v95 = vpop.permute.xlu0 %94
    %96 = vrot.lane.b32.xlu0 %v92, 127
    %v97 = vpop.permute.xlu0 %96
    %v98 = vld [vmem:[#allocation5 + $0x3] sm:$0x1]
    %v99 = vperm.slane %v98, 0
    %v100 = vmul.f32 %v99, %v95
    %v101 = vmul.f32 %v99, %v97
    %v102 = vadd.f32 %v89, %v100
    %v103 = vadd.f32 %v92, %v101
    %104 = vrot.lane.b32.xlu0 %v89, 1
    %v105 = vpop.permute.xlu0 %104
    %106 = vrot.lane.b32.xlu0 %v92, 1
    %v107 = vpop.permute.xlu0 %106
    %v108 = vld [vmem:[#allocation5 + $0x1] sm:$0x1]
    %v109 = vperm.slane %v108, 0
    %v110 = vmul.f32 %v109, %v105
    %v111 = vmul.f32 %v109, %v107
    %v112 = vadd.f32 %v102, %v110
    %v113 = vadd.f32 %v103, %v111
    %114 = vrot.lane.b32.xlu0 %v89, 126
    %v115 = vpop.permute.xlu0 %114
    %116 = vrot.lane.b32.xlu0 %v92, 126
    %v117 = vpop.permute.xlu0 %116
    %v118 = vld [vmem:[#allocation5 + $0x4] sm:$0x1]
    %v119 = vperm.slane %v118, 0
    %v120 = vmul.f32 %v119, %v115
    %v121 = vmul.f32 %v119, %v117
    %v122 = vadd.f32 %v112, %v120
    %v123 = vadd.f32 %v113, %v121
    %124 = vrot.lane.b32.xlu0 %v89, 2
    %v125 = vpop.permute.xlu0 %124
    %126 = vrot.lane.b32.xlu0 %v92, 2
    %v127 = vpop.permute.xlu0 %126
    %v128 = vld [vmem:[#allocation5] sm:$0x1]
    %v129 = vperm.slane %v128, 0
    %v130 = vmul.f32 %v129, %v125
    %v131 = vmul.f32 %v129, %v127
    %v132 = vadd.f32 %v122, %v130
    %v133 = vadd.f32 %v123, %v131
    %134 = vst [vmem:[#allocation8] sm:$0xff] %v132
    %135 = vst [vmem:[#allocation8 + $0x8] sm:$0xff] %v133
    // Predicated region
    $region26: #{tpu_custom_call.1} parent=1 // pred_check
      _
    $region27: #{tpu_custom_call.1} parent=1 // pred_check_branch
      %137 = sbr.rel (0) target = $region29
    $region28: #{tpu_custom_call.1} parent=1 // pred_region
      %139 = vsyncadd [#allocation4], 0
      %s140 = sshll.u32 [#allocation8], 4
      %s141 = int_to_ptr.vmem [resolvable:$true] %s140
      %s142 = sshll.u32 %s3, 4
      %s143 = int_to_ptr.hbm [resolvable:$true] %s142
      %148 = dma.vmem_to_hbm [thread:$0]  %s141, 256, %s143, [#allocation4], 128, 128, 8
    $region29: #{tpu_custom_call.1} parent=1 // pred_fallthru
      _
    // Predicated region
    $region30: #{tpu_custom_call.1} parent=1 // pred_check
      _
    $region31: #{tpu_custom_call.1} parent=1 // pred_check_branch
      %150 = sbr.rel (0) target = $region33
    $region32: #{tpu_custom_call.1} parent=1 // pred_region
      %152 = dma.done [#allocation4], 256
    $region33: #{tpu_custom_call.1} parent=1 // pred_fallthru
      _
    %153 = vsyncpa [#allocation3], 1
    %154 = vsyncpa [#allocation6], 1
    %155 = vsyncpa [#allocation4], 1

</llo_original>
